<compile_context>
chip_gen: v6e
topology: v6e:2x2x1
jax: 0.10.0
libtpu: 0.0.40
codegen_flags: <defaults>
</compile_context>

<pallas_src>
import math

import jax
import jax.numpy as jnp
from jax import lax
from jax.experimental import pallas as pl
from jax.experimental.pallas import tpu as pltpu


def _pixelnorm_kernel(x_ref, o_ref, *, scale):
    # x_ref / o_ref: (N_B, C, T_HW) block. Reduction is over axis=1 (channels),
    # independently per pixel, so tiling N and HW is embarrassingly parallel.
    x = x_ref[...]
    xf = x.astype(jnp.float32)                         # upcast only for the accumulation
    sumsq = jnp.sum(xf * xf, axis=1, keepdims=True)    # (N_B, 1, T_HW) in f32 (XLU sublane reduce)
    # rsqrt runs on the EUP (its own VLIW slot) on the small (N_B, 1, T_HW) vector;
    # the big tile then only sees a single broadcast multiply (no vector divide).
    # NOTE: like the PyTorch forward, no eps -> an all-zero channel vector yields inf/NaN.
    coef = (lax.rsqrt(sumsq) * scale).astype(x.dtype)  # keep the hot multiply in input dtype
    o_ref[...] = (x * coef).astype(o_ref.dtype)


def _pick_tiles(N, C, HW, itemsize, target_bytes=2 * 1024 * 1024):
    """Choose (N_B, T_HW) so each (N_B, C, T_HW) block is lane-dense and ~target_bytes.

    VMEM footprint is estimated with the channel dim padded to the 8-sublane tile
    (matters for small C, e.g. C=4 occupies 8 sublanes per image slice).
    """
    c_pad = -(-C // 8) * 8                 # sublane-padded channel count in VMEM
    per_column = c_pad * itemsize          # bytes of one padded (C, 1) pixel column
    per_image = per_column * HW

    if per_image <= target_bytes:
        # One image already fits: take full HW (always a legal block extent) and
        # fold as many whole batch elements as fit the target into each block.
        n_b = max(1, min(N, target_bytes // per_image))
        while N % n_b:                     # prefer an exact divisor -> no partial blocks
            n_b -= 1
        return n_b, HW

    # Large image: one image per block along N, tile HW in lane-dense chunks.
    max_thw = max(128, (target_bytes // per_column) // 128 * 128)
    if HW % 128 == 0:
        t_hw = 128
        for cand in range(256, min(HW, max_thw) + 1, 128):
            if HW % cand == 0:
                t_hw = cand
        return 1, t_hw

    # HW not a multiple of 128: either take the full spatial extent (legal because it
    # equals the array dim) or a lane-dense tile whose partial boundary block Pallas
    # masks on store (per-lane math, so padded lanes never contaminate valid ones).
    if HW <= max_thw:
        return 1, HW
    return 1, max_thw


def pixel_norm(x):
    """x: (N, C, H, W). Returns x / ||x||_2(over C) * sqrt(C) (PixelNormLayer.forward)."""
    N, C, H, W = x.shape
    HW = H * W
    scale = math.sqrt(C)
    itemsize = jnp.dtype(x.dtype).itemsize

    x_flat = x.reshape(N, C, HW)
    n_b, t_hw = _pick_tiles(N, C, HW, itemsize)

    grid = (pl.cdiv(N, n_b), pl.cdiv(HW, t_hw))
    block = (n_b, C, t_hw)
    index_map = lambda n, h: (n, 0, h)

    kernel = lambda x_ref, o_ref: _pixelnorm_kernel(x_ref, o_ref, scale=scale)

    # Purely memory-bound custom call: tell XLA its real size so surrounding ops schedule sanely.
    cost = pl.CostEstimate(
        flops=3 * N * C * HW,
        transcendentals=N * HW,
        bytes_accessed=2 * N * C * HW * itemsize,
    )

    out_flat = pl.pallas_call(
        kernel,
        out_shape=jax.ShapeDtypeStruct((N, C, HW), x.dtype),
        grid_spec=pltpu.PrefetchScalarGridSpec(
            num_scalar_prefetch=0,
            grid=grid,
            in_specs=[pl.BlockSpec(block, index_map)],
            out_specs=pl.BlockSpec(block, index_map),
        ),
        compiler_params=pltpu.CompilerParams(
            dimension_semantics=("parallel", "parallel"),
        ),
        cost_estimate=cost,
    )(x_flat)

    return out_flat.reshape(N, C, H, W)


if __name__ == "__main__":
    key = jax.random.PRNGKey(0)
    N, C, H, W = 2, 4, 16, 16
    x = jax.random.normal(key, (N, C, H, W), dtype=jnp.float32)

    out = pixel_norm(x)
    out = jax.block_until_ready(out)

    # Reference check in plain JAX (same math as the PyTorch forward).
    ref = x / jnp.linalg.norm(x, axis=1, keepdims=True) * math.sqrt(C)
    assert out.shape == x.shape
    assert jnp.allclose(out, ref, atol=1e-5, rtol=1e-5)

    print("KERNEL_OK")
</pallas_src>

<mosaic_0001>
module attributes {stable_mosaic.version = 11 : i64} {
  func.func @_lambda_(%arg0: i32, %arg1: i32, %arg2: memref<2x4x256xf32, #tpu.memory_space<vmem>>, %arg3: memref<2x4x256xf32, #tpu.memory_space<vmem>>) attributes {dimension_semantics = [#tpu.dimension_semantics<parallel>, #tpu.dimension_semantics<parallel>], iteration_bounds = array<i64: 1, 1>, scalar_prefetch = 0 : i64, scratch_operands = 0 : i64, tpu.core_type = #tpu.core_type<tc>, window_params = [{transform_indices = @transform_0, window_bounds = array<i64: 2, 4, 256>}, {transform_indices = @transform_1, window_bounds = array<i64: 2, 4, 256>}]} {
    %c0 = arith.constant 0 : index
    %c0_0 = arith.constant 0 : index
    %c0_1 = arith.constant 0 : index
    %0 = vector.load %arg2[%c0, %c0_0, %c0_1] : memref<2x4x256xf32, #tpu.memory_space<vmem>>, vector<2x4x256xf32>
    %1 = arith.mulf %0, %0 : vector<2x4x256xf32>
    %cst = arith.constant dense<0.000000e+00> : vector<2x256xf32>
    %2 = vector.multi_reduction <add>, %1, %cst [1] : vector<2x4x256xf32> to vector<2x256xf32>
    %3 = vector.shape_cast %2 : vector<2x256xf32> to vector<2x1x256xf32>
    %4 = math.rsqrt %3 : vector<2x1x256xf32>
    %cst_2 = arith.constant 2.000000e+00 : f32
    %5 = vector.broadcast %cst_2 : f32 to vector<2x1x256xf32>
    %6 = arith.mulf %4, %5 : vector<2x1x256xf32>
    %7 = vector.broadcast %6 : vector<2x1x256xf32> to vector<2x4x256xf32>
    %8 = arith.mulf %0, %7 : vector<2x4x256xf32>
    %c0_3 = arith.constant 0 : index
    %c0_4 = arith.constant 0 : index
    %c0_5 = arith.constant 0 : index
    %9 = vector.load %arg3[%c0_3, %c0_4, %c0_5] : memref<2x4x256xf32, #tpu.memory_space<vmem>>, vector<2x4x256xf32>
    tpu.vector_store %arg3[%c0_3, %c0_4, %c0_5], %8 {strides = array<i32>} : memref<2x4x256xf32, #tpu.memory_space<vmem>>, vector<2x4x256xf32>,
    return
  }
  func.func @transform_0(%arg0: i32, %arg1: i32) -> (i32, i32, i32) {
    %c0_i32 = arith.constant 0 : i32
    %c0_i32_0 = arith.constant 0 : i32
    return %arg0, %c0_i32, %arg1 : i32, i32, i32
  }
  func.func @transform_1(%arg0: i32, %arg1: i32) -> (i32, i32, i32) {
    %c0_i32 = arith.constant 0 : i32
    %c0_i32_0 = arith.constant 0 : i32
    return %arg0, %c0_i32, %arg1 : i32, i32, i32
  }
}

</mosaic_0001>

<llo_original>
// kernel: tpu_custom_call.1
$region0: #{tpu_custom_call.1}
  #allocation0 [shape = 'u32[]', space=smem, size = 0x4, offset = 0x4, fixed_abs, tag = 'smem constant byte address 0x4 - core index']
  #allocation1 [shape = 'u32[144,128]{1,0:T(1,128)}', space=vmem, size = 0x12000, scoped, tag = 'internal scratch']
  %s0 = inlined_call_operand.hbm [shape: f32[2,4,256], index: 0, kind: input, shape index: {}]
  %s1 = inlined_call_operand.hbm [shape: f32[2,4,256], index: 1, kind: output, shape index: {}]
  %s2 = sld [smem:[#allocation0]]
  $region18: #{tpu_custom_call.1} parent=0
    _
  %s4 = ssub.s32 1, %s2
  %s5 = scalar_select 0, %s4, %s2
  $region1: #{tpu_custom_call.1} parent=0
    #allocation2 [shape = 'u8[8192]{0}', space=vmem, size = 0x2000, scoped, tag = 'input window, operand 0, single buffered']
    #allocation3 [shape = 's32[1]{0}', space=sflag, size = 0x4, scoped, tag = 'scoped memory for tpu_custom_call.1']
    #allocation4 [shape = 's32[1]{0}', space=sflag, size = 0x4, scoped, tag = 'scoped memory for tpu_custom_call.1']
    #allocation5 [shape = 'u8[8192]{0}', space=vmem, size = 0x2000, scoped, tag = 'output window, operand 0, single buffered']
    %6 = vsyncpa [#allocation3], 0
    %7 = vsyncpa [#allocation4], 0
    // Predicated region
    $region2: #{tpu_custom_call.1} parent=1 // pred_check
      _
    $region3: #{tpu_custom_call.1} parent=1 // pred_check_branch
      %9 = sbr.rel (0) target = $region5
    $region4: #{tpu_custom_call.1} parent=1 // pred_region
      %s11 = ssub.s32 256, 256
      %12 = vsyncadd [#allocation3], %s11
      %s13 = sshll.u32 [#allocation2], 4
      %s14 = int_to_ptr.vmem [resolvable:$true] %s13
      %19 = dma.hbm_to_vmem [thread:$0]  %s0, 256, %s14, [#allocation3], 128, 128, 8
    $region5: #{tpu_custom_call.1} parent=1 // pred_fallthru
      _
    // Predicated region
    $region6: #{tpu_custom_call.1} parent=1 // pred_check
      _
    $region7: #{tpu_custom_call.1} parent=1 // pred_check_branch
      %21 = sbr.rel (0) target = $region9
    $region8: #{tpu_custom_call.1} parent=1 // pred_region
      %22 = dma.done [#allocation3], 256
    $region9: #{tpu_custom_call.1} parent=1 // pred_fallthru
      _
    %v23 = vld [vmem:[#allocation2] sm:$0xff]
    %v24 = vld [vmem:[#allocation2 + $0x8] sm:$0xff]
    %v25 = vmul.f32 %v23, %v23
    %v26 = vmul.f32 %v24, %v24
    %v29 = vcombine.high %v25, %v25
    %v30 = vcombine.high %v26, %v26
    %vm33 = vcmask 1043456
    %v34 = vsel %vm33, %v25, 0.0
    %v35 = vrot.slane %v34, 4
    %v36 = vadd.f32 %v34, %v35
    %v37 = vrot.slane %v36, 2
    %v38 = vadd.f32 %v36, %v37
    %v39 = vrot.slane %v38, 1
    %v40 = vadd.f32 %v38, %v39
    %v41 = vsel %vm33, %v29, 0.0
    %v42 = vrot.slane %v41, 4
    %v43 = vadd.f32 %v41, %v42
    %v44 = vrot.slane %v43, 2
    %v45 = vadd.f32 %v43, %v44
    %v46 = vrot.slane %v45, 1
    %v47 = vadd.f32 %v45, %v46
    %v48 = vsel %vm33, %v26, 0.0
    %v49 = vrot.slane %v48, 4
    %v50 = vadd.f32 %v48, %v49
    %v51 = vrot.slane %v50, 2
    %v52 = vadd.f32 %v50, %v51
    %v53 = vrot.slane %v52, 1
    %v54 = vadd.f32 %v52, %v53
    %v55 = vsel %vm33, %v30, 0.0
    %v56 = vrot.slane %v55, 4
    %v57 = vadd.f32 %v55, %v56
    %v58 = vrot.slane %v57, 2
    %v59 = vadd.f32 %v57, %v58
    %v60 = vrot.slane %v59, 1
    %v61 = vadd.f32 %v59, %v60
    %v62 = vrsqrt.pop %v40
    %v63 = vrsqrt.pop %v47
    %v64 = vrsqrt.pop %v54
    %v65 = vrsqrt.pop %v61
    %v66 = vmul.f32 %v62, 2.0
    %v67 = vmul.f32 %v63, 2.0
    %v68 = vmul.f32 %v64, 2.0
    %v69 = vmul.f32 %v65, 2.0
    %v74 = vcombine.low %v66, %v67
    %v75 = vcombine.low %v68, %v69
    %v78 = vmul.f32 %v23, %v74
    %v79 = vmul.f32 %v24, %v75
    %80 = vst [vmem:[#allocation5] sm:$0xff] %v78
    %81 = vst [vmem:[#allocation5 + $0x8] sm:$0xff] %v79
    // Predicated region
    $region10: #{tpu_custom_call.1} parent=1 // pred_check
      _
    $region11: #{tpu_custom_call.1} parent=1 // pred_check_branch
      %83 = sbr.rel (0) target = $region13
    $region12: #{tpu_custom_call.1} parent=1 // pred_region
      %s85 = ssub.s32 256, 256
      %86 = vsyncadd [#allocation4], %s85
      %s87 = sshll.u32 [#allocation5], 4
      %s88 = int_to_ptr.vmem [resolvable:$true] %s87
      %93 = dma.vmem_to_hbm [thread:$0]  %s88, 256, %s1, [#allocation4], 128, 128, 8
    $region13: #{tpu_custom_call.1} parent=1 // pred_fallthru
      _
    // Predicated region
    $region14: #{tpu_custom_call.1} parent=1 // pred_check
      _
    $region15: #{tpu_custom_call.1} parent=1 // pred_check_branch
      %95 = sbr.rel (0) target = $region17
    $region16: #{tpu_custom_call.1} parent=1 // pred_region
      %96 = dma.done [#allocation4], 256
    $region17: #{tpu_custom_call.1} parent=1 // pred_fallthru
      _
    %97 = vsyncpa [#allocation3], 1
    %98 = vsyncpa [#allocation4], 1

</llo_original>
